<compile_context>
chip_gen: v7x
topology: tpu7x:2x2x1
jax: 0.10.0
libtpu: 0.0.40
codegen_flags: <defaults>
</compile_context>

<pallas_src>
import jax
import jax.numpy as jnp
from jax.experimental import pallas as pl
from jax.experimental.pallas import tpu as pltpu


def _copy_kernel(x_ref, o_ref):
    """Single dense full-tile copy: one unmasked load + one unmasked store
    per vreg row. No sublane selects, no masked vst.msk stores."""
    o_ref[...] = x_ref[...]


def _pick_width(n: int) -> int:
    """Largest lane-dense width (multiple of 128) that evenly divides n.
    Returns 0 if none exists (caller falls back to the natural last dim)."""
    for w in (4096, 2048, 1024, 512, 256, 128):
        if n % w == 0:
            return w
    return 0


def _pick_row_tile(rows: int, width: int, itemsize: int) -> int:
    """Largest row tile that (a) divides rows, (b) is a multiple of 8 or equals
    rows (so the (8,128) block rule holds), and (c) keeps one block <= ~4 MiB
    so 2 arrays x 2 double-buffers fit comfortably in v7x's 32 MiB scoped
    VMEM default while still being big enough to reach HBM roofline."""
    max_bytes = 4 * 1024 * 1024
    max_rows = max(8, max_bytes // max(1, width * itemsize))
    if rows <= max_rows:
        return rows                      # full extent is always a legal block
    start = max_rows - (max_rows % 8)
    for tr in range(start, 7, -8):
        if rows % tr == 0:
            return tr
    return rows                          # no good divisor: single big block


def _identity_copy(x2d: jax.Array) -> jax.Array:
    """Pallas lane-dense tiled copy of a 2-D array."""
    rows, cols = x2d.shape
    tr = _pick_row_tile(rows, cols, jnp.dtype(x2d.dtype).itemsize)
    grid = (rows // tr,)
    return pl.pallas_call(
        _copy_kernel,
        out_shape=jax.ShapeDtypeStruct((rows, cols), x2d.dtype),
        grid=grid,
        in_specs=[pl.BlockSpec((tr, cols), lambda i: (i, 0))],
        out_specs=pl.BlockSpec((tr, cols), lambda i: (i, 0)),
        # Parallel grid axis so v7x's 2 TensorCores both stream DMA when the
        # grid has >1 step (near-zero effect on single-TC v5e/v6e).
        compiler_params=pltpu.CompilerParams(
            dimension_semantics=("parallel",)),
    )(x2d)


def skeleton_embedding(x: jax.Array) -> jax.Array:
    """Pallas implementation of SkeletonEmbedding.forward."""
    # 1) Semantic reshape — free (metadata only), identical to torch.reshape
    #    on a contiguous tensor.
    if x.ndim == 4:
        B, T, J, C = x.shape
        F = J * C
    else:
        B, T, F = x.shape
    out_shape = (B, T, F)

    # 2) Present the data to the kernel as a lane-dense 2-D slab: last dim a
    #    large multiple of 128 when possible (unmasked dense stores), else the
    #    natural feature dim (full-dim last axis is always a legal block).
    n = B * T * F
    width = _pick_width(n)
    if width == 0:
        flat = x.reshape(B * T, F)
    else:
        flat = x.reshape(n // width, width)

    out2d = _identity_copy(flat)
    return out2d.reshape(out_shape)


if __name__ == "__main__":
    key = jax.random.PRNGKey(0)

    # 4-D path: batch=2, seq_len=8, num_joints=4, coords=3
    B, T, J, C = 2, 8, 4, 3
    x4 = jax.random.normal(key, (B, T, J, C), dtype=jnp.float32)
    out4 = jax.block_until_ready(skeleton_embedding(x4))
    ref4 = x4.reshape(B, T, J * C)
    assert out4.shape == (B, T, J * C)
    assert jnp.allclose(out4, ref4), "4-D path mismatch"

    # 3-D pass-through path
    x3 = jax.random.normal(jax.random.PRNGKey(1), (B, T, J * C),
                           dtype=jnp.float32)
    out3 = jax.block_until_ready(skeleton_embedding(x3))
    assert jnp.allclose(out3, x3), "3-D path mismatch"

    # 4-D path that hits the lane-dense (multiple-of-128) layout: F=16, n=512.
    x4b = jax.random.normal(jax.random.PRNGKey(2), (2, 16, 4, 4),
                            dtype=jnp.float32)
    out4b = jax.block_until_ready(skeleton_embedding(x4b))
    assert jnp.allclose(out4b, x4b.reshape(2, 16, 16)), "lane-dense path mismatch"

    print("KERNEL_OK")
</pallas_src>

<mosaic_0001>
module attributes {stable_mosaic.version = 11 : i64} {
  func.func @_copy_kernel(%arg0: i32, %arg1: memref<16x12xf32, #tpu.memory_space<vmem>>, %arg2: memref<16x12xf32, #tpu.memory_space<vmem>>) attributes {dimension_semantics = [#tpu.dimension_semantics<parallel>], iteration_bounds = array<i64: 1>, scalar_prefetch = 0 : i64, scratch_operands = 0 : i64, tpu.core_type = #tpu.core_type<tc>, window_params = [{transform_indices = @transform_0, window_bounds = array<i64: 16, 12>}, {transform_indices = @transform_1, window_bounds = array<i64: 16, 12>}]} {
    %c0 = arith.constant 0 : index
    %c0_0 = arith.constant 0 : index
    %0 = vector.load %arg1[%c0, %c0_0] : memref<16x12xf32, #tpu.memory_space<vmem>>, vector<16x12xf32>
    %c0_1 = arith.constant 0 : index
    %c0_2 = arith.constant 0 : index
    %1 = vector.load %arg2[%c0_1, %c0_2] : memref<16x12xf32, #tpu.memory_space<vmem>>, vector<16x12xf32>
    tpu.vector_store %arg2[%c0_1, %c0_2], %0 {strides = array<i32>} : memref<16x12xf32, #tpu.memory_space<vmem>>, vector<16x12xf32>,
    return
  }
  func.func @transform_0(%arg0: i32) -> (i32, i32) {
    %c0_i32 = arith.constant 0 : i32
    %c0_i32_0 = arith.constant 0 : i32
    return %arg0, %c0_i32 : i32, i32
  }
  func.func @transform_1(%arg0: i32) -> (i32, i32) {
    %c0_i32 = arith.constant 0 : i32
    %c0_i32_0 = arith.constant 0 : i32
    return %arg0, %c0_i32 : i32, i32
  }
}

</mosaic_0001>

<llo_original>
// kernel: tpu_custom_call.1
$region0: #{tpu_custom_call.1}
  #allocation0 [shape = 'u32[]', space=smem, size = 0x4, offset = 0x4, fixed_abs, tag = 'smem constant byte address 0x4 - core index']
  #allocation1 [shape = 'u32[144,128]{1,0:T(1,128)}', space=vmem, size = 0x12000, scoped, tag = 'internal scratch']
  %s0 = inlined_call_operand.hbm [shape: f32[16,12], index: 0, kind: input, shape index: {}]
  %s1 = inlined_call_operand.hbm [shape: f32[16,12], index: 1, kind: output, shape index: {}]
  %s2 = sld [smem:[#allocation0]]
  $region18: #{tpu_custom_call.1} parent=0
    _
  %s4 = ssub.s32 1, %s2
  %s5 = scalar_select 0, %s4, %s2
  $region1: #{tpu_custom_call.1} parent=0
    #allocation2 [shape = 'u8[8192]{0}', space=vmem, size = 0x2000, scoped, tag = 'input window, operand 0, single buffered']
    #allocation3 [shape = 's32[1]{0}', space=sflag, size = 0x4, scoped, tag = 'scoped memory for tpu_custom_call.1']
    #allocation4 [shape = 's32[1]{0}', space=sflag, size = 0x4, scoped, tag = 'scoped memory for tpu_custom_call.1']
    #allocation5 [shape = 'u8[8192]{0}', space=vmem, size = 0x2000, scoped, tag = 'output window, operand 0, single buffered']
    %6 = vsyncpa [#allocation3], 0
    %7 = vsyncpa [#allocation4], 0
    // Predicated region
    $region2: #{tpu_custom_call.1} parent=1 // pred_check
      _
    $region3: #{tpu_custom_call.1} parent=1 // pred_check_branch
      %9 = sbr.rel (0) target = $region5
    $region4: #{tpu_custom_call.1} parent=1 // pred_region
      %s11 = ssub.s32 256, 256
      %12 = vsyncadd [#allocation3], %s11
      %s13 = sshll.u32 [#allocation2], 4
      %s14 = int_to_ptr.vmem [resolvable:$true] %s13
      %19 = dma.hbm_to_vmem [thread:$0]  %s0, 256, %s14, [#allocation3], 128, 128, 8
    $region5: #{tpu_custom_call.1} parent=1 // pred_fallthru
      _
    // Predicated region
    $region6: #{tpu_custom_call.1} parent=1 // pred_check
      _
    $region7: #{tpu_custom_call.1} parent=1 // pred_check_branch
      %21 = sbr.rel (0) target = $region9
    $region8: #{tpu_custom_call.1} parent=1 // pred_region
      %22 = dma.done [#allocation3], 256
    $region9: #{tpu_custom_call.1} parent=1 // pred_fallthru
      _
    %v23 = vld [vmem:[#allocation2] sm:$0xff]
    %v24 = vld [vmem:[#allocation2 + $0x8] sm:$0xff]
    %vm25 = vcmask 97280
    %26 = vst.msk [vmem:[#allocation5] sm:$0xff] %vm25, %v23
    %27 = vst.msk [vmem:[#allocation5 + $0x8] sm:$0xff] %vm25, %v24
    // Predicated region
    $region10: #{tpu_custom_call.1} parent=1 // pred_check
      _
    $region11: #{tpu_custom_call.1} parent=1 // pred_check_branch
      %29 = sbr.rel (0) target = $region13
    $region12: #{tpu_custom_call.1} parent=1 // pred_region
      %s31 = ssub.s32 256, 256
      %32 = vsyncadd [#allocation4], %s31
      %s33 = sshll.u32 [#allocation5], 4
      %s34 = int_to_ptr.vmem [resolvable:$true] %s33
      %39 = dma.vmem_to_hbm [thread:$0]  %s34, 256, %s1, [#allocation4], 128, 128, 8
    $region13: #{tpu_custom_call.1} parent=1 // pred_fallthru
      _
    // Predicated region
    $region14: #{tpu_custom_call.1} parent=1 // pred_check
      _
    $region15: #{tpu_custom_call.1} parent=1 // pred_check_branch
      %41 = sbr.rel (0) target = $region17
    $region16: #{tpu_custom_call.1} parent=1 // pred_region
      %42 = dma.done [#allocation4], 256
    $region17: #{tpu_custom_call.1} parent=1 // pred_fallthru
      _
    %43 = vsyncpa [#allocation3], 1
    %44 = vsyncpa [#allocation4], 1

</llo_original>
